<compile_context>
chip_gen: v7x
topology: tpu7x:2x2x1
jax: 0.10.0
libtpu: 0.0.40
codegen_flags: <defaults>
</compile_context>

<pallas_src>
import functools

import jax
import jax.numpy as jnp
from jax.experimental import pallas as pl
from jax.experimental.pallas import tpu as pltpu


def _round_up(x, m):
    return (x + m - 1) // m * m


def _ffn_kernel(x_ref, w1_ref, b1_ref, w2_ref, b2_ref, o_ref, acc_ref):
    # x_ref:   (tm, dmp)   bf16
    # w1_ref:  (dmp, tff)  bf16     b1_ref: (1, tff)  f32
    # w2_ref:  (tff, dmp)  bf16     b2_ref: (1, dmp)  f32
    # o_ref:   (tm, dmp)   x.dtype
    # acc_ref: (tm, dmp)   f32 scratch, persists across the d_ff grid axis
    j = pl.program_id(1)

    @pl.when(j == 0)
    def _():
        acc_ref[...] = jnp.zeros_like(acc_ref)

    # First matmul on the MXU, f32 accumulation.
    h = jnp.dot(x_ref[...], w1_ref[...], preferred_element_type=jnp.float32)
    h = h + b1_ref[...]                  # bias in f32
    h = jnp.maximum(h, 0.0)              # ReLU in f32 (native VPU path on v5e)
    # dropout (p=0.1) is identity at inference time

    # Second matmul: single f32->bf16 cast, accumulate in f32 across d_ff tiles.
    acc_ref[...] += jnp.dot(h.astype(w2_ref.dtype), w2_ref[...],
                            preferred_element_type=jnp.float32)

    @pl.when(j == pl.num_programs(1) - 1)
    def _():
        o_ref[...] = (acc_ref[...] + b2_ref[...]).astype(o_ref.dtype)


@functools.partial(jax.jit, static_argnames=("tm", "tff"))
def feed_forward(x, w1, b1, w2, b2, *, tm=256, tff=512):
    """x: (batch, seq, d_model) float32. Returns same shape.

    Weights are stored transposed relative to PyTorch (W1: (d_model, d_ff),
    W2: (d_ff, d_model)) so the kernel computes y = x @ W + b directly.
    """
    batch, seq, d_model = x.shape
    d_ff = w1.shape[1]
    M = batch * seq

    # Lane-dense (multiple-of-128) feature dims; row tile multiple of 8.
    dmp = _round_up(d_model, 128)
    tm_eff = min(tm, _round_up(M, 8))
    Mp = _round_up(M, tm_eff)
    dffp = _round_up(d_ff, 128)
    tff_eff = min(tff, dffp)
    dffp = _round_up(dffp, tff_eff)

    # Zero-padded, bf16-cast operands (zeros in the padded region keep the
    # math identical: padded d_ff columns give relu(0)=0 and padded W2 rows
    # are zero; padded d_model/out columns are sliced off below).
    x2d = x.reshape(M, d_model)
    x_p = jnp.zeros((Mp, dmp), jnp.bfloat16).at[:M, :d_model].set(
        x2d.astype(jnp.bfloat16))
    w1_p = jnp.zeros((dmp, dffp), jnp.bfloat16).at[:d_model, :d_ff].set(
        w1.astype(jnp.bfloat16))
    b1_p = jnp.zeros((1, dffp), jnp.float32).at[0, :d_ff].set(b1)
    w2_p = jnp.zeros((dffp, dmp), jnp.bfloat16).at[:d_ff, :d_model].set(
        w2.astype(jnp.bfloat16))
    b2_p = jnp.zeros((1, dmp), jnp.float32).at[0, :d_model].set(b2)

    grid = (Mp // tm_eff, dffp // tff_eff)

    # Advisory cost estimate for XLA's scheduler.
    out_itemsize = jnp.dtype(x.dtype).itemsize
    flops = 4 * M * d_model * d_ff                    # two matmuls
    bytes_accessed = (x_p.size * 2 + w1_p.size * 2 + w2_p.size * 2
                      + b1_p.size * 4 + b2_p.size * 4 + Mp * dmp * out_itemsize)
    cost = pl.CostEstimate(flops=int(flops), transcendentals=0,
                           bytes_accessed=int(bytes_accessed))

    # Explicit scoped-VMEM limit (v5e's default is only 16 MiB).
    per_step_vmem = (2 * (tm_eff * dmp * 2            # x tiles (bf16, dbl-buf)
                          + dmp * tff_eff * 2         # W1 tile
                          + tff_eff * dmp * 2         # W2 tile
                          + tff_eff * 4 + dmp * 4     # biases (f32)
                          + tm_eff * dmp * out_itemsize)   # out tiles
                     + tm_eff * dmp * 4               # f32 accumulator scratch
                     + tm_eff * tff_eff * 4)          # f32 intermediate h
    vmem_limit = int(min(96 * 1024 * 1024,
                         max(32 * 1024 * 1024, 2 * per_step_vmem)))

    out_p = pl.pallas_call(
        _ffn_kernel,
        out_shape=jax.ShapeDtypeStruct((Mp, dmp), x.dtype),
        grid_spec=pltpu.PrefetchScalarGridSpec(
            num_scalar_prefetch=0,
            grid=grid,
            in_specs=[
                pl.BlockSpec((tm_eff, dmp), lambda i, j: (i, 0)),      # x rows
                pl.BlockSpec((dmp, tff_eff), lambda i, j: (0, j)),     # W1 tile
                pl.BlockSpec((1, tff_eff), lambda i, j: (0, j)),       # b1 tile
                pl.BlockSpec((tff_eff, dmp), lambda i, j: (j, 0)),     # W2 tile
                pl.BlockSpec((1, dmp), lambda i, j: (0, 0)),           # b2
            ],
            out_specs=pl.BlockSpec((tm_eff, dmp), lambda i, j: (i, 0)),
            scratch_shapes=[pltpu.VMEM((tm_eff, dmp), jnp.float32)],
        ),
        compiler_params=pltpu.CompilerParams(
            dimension_semantics=("parallel", "arbitrary"),
            vmem_limit_bytes=vmem_limit),
        cost_estimate=cost,
    )(x_p, w1_p, b1_p, w2_p, b2_p)

    return out_p[:M, :d_model].reshape(batch, seq, d_model)


def init_params(key, d_model, d_ff):
    """Deterministic init mirroring nn.Linear's U(-1/sqrt(fan_in), 1/sqrt(fan_in)).

    Weights are stored transposed relative to PyTorch so the kernel does
    y = x @ W + b directly.
    """
    k1, k2, k3, k4 = jax.random.split(key, 4)
    bound1 = 1.0 / (d_model ** 0.5)
    bound2 = 1.0 / (d_ff ** 0.5)
    w1 = jax.random.uniform(k1, (d_model, d_ff), jnp.float32, -bound1, bound1)
    b1 = jax.random.uniform(k2, (d_ff,), jnp.float32, -bound1, bound1)
    w2 = jax.random.uniform(k3, (d_ff, d_model), jnp.float32, -bound2, bound2)
    b2 = jax.random.uniform(k4, (d_model,), jnp.float32, -bound2, bound2)
    return w1, b1, w2, b2


if __name__ == "__main__":
    d_model = 32
    d_ff = 256
    batch = 2
    seq = 8

    key = jax.random.PRNGKey(0)
    kx, kp = jax.random.split(key)
    x = jax.random.normal(kx, (batch, seq, d_model), jnp.float32)
    w1, b1, w2, b2 = init_params(kp, d_model, d_ff)

    out = feed_forward(x, w1, b1, w2, b2)
    out = jax.block_until_ready(out)

    # Reference check in plain JAX, mirroring the kernel's bf16 inputs with f32
    # accumulation (dropout is identity at inference).
    xb = x.astype(jnp.bfloat16).astype(jnp.float32)
    w1b = w1.astype(jnp.bfloat16).astype(jnp.float32)
    w2b = w2.astype(jnp.bfloat16).astype(jnp.float32)
    h = jnp.maximum(xb @ w1b + b1, 0.0)
    ref = h.astype(jnp.bfloat16).astype(jnp.float32) @ w2b + b2

    assert out.shape == (batch, seq, d_model)
    assert jnp.allclose(out, ref, atol=2e-2, rtol=2e-2), (
        float(jnp.max(jnp.abs(out - ref))))

    print("KERNEL_OK")
</pallas_src>

<mosaic_0001>
module attributes {stable_mosaic.version = 11 : i64} {
  func.func @_ffn_kernel(%arg0: i32, %arg1: i32, %arg2: memref<16x128xbf16, #tpu.memory_space<vmem>>, %arg3: memref<128x256xbf16, #tpu.memory_space<vmem>>, %arg4: memref<1x256xf32, #tpu.memory_space<vmem>>, %arg5: memref<256x128xbf16, #tpu.memory_space<vmem>>, %arg6: memref<1x128xf32, #tpu.memory_space<vmem>>, %arg7: memref<16x128xf32, #tpu.memory_space<vmem>>, %arg8: memref<16x128xf32, #tpu.memory_space<vmem>>) attributes {dimension_semantics = [#tpu.dimension_semantics<parallel>, #tpu.dimension_semantics<arbitrary>], iteration_bounds = array<i64: 1, 1>, scalar_prefetch = 0 : i64, scratch_operands = 1 : i64, tpu.core_type = #tpu.core_type<tc>, window_params = [{transform_indices = @transform_0, window_bounds = array<i64: 16, 128>}, {transform_indices = @transform_1, window_bounds = array<i64: 128, 256>}, {transform_indices = @transform_2, window_bounds = array<i64: 1, 256>}, {transform_indices = @transform_3, window_bounds = array<i64: 256, 128>}, {pipeline_mode = #tpu.pipeline_mode<synchronous>, transform_indices = @transform_4, window_bounds = array<i64: 1, 128>}, {transform_indices = @transform_5, window_bounds = array<i64: 16, 128>}]} {
    %c0_i32 = arith.constant 0 : i32
    %0 = arith.cmpi eq, %arg1, %c0_i32 : i32
    %1 = arith.extui %0 : i1 to i32
    %c0_i32_0 = arith.constant 0 : i32
    %2 = arith.cmpi ne, %1, %c0_i32_0 : i32
    scf.if %2 {
      %cst_16 = arith.constant 0.000000e+00 : f32
      %20 = vector.broadcast %cst_16 : f32 to vector<16x128xf32>
      %c0_17 = arith.constant 0 : index
      %c0_18 = arith.constant 0 : index
      %21 = vector.load %arg8[%c0_17, %c0_18] : memref<16x128xf32, #tpu.memory_space<vmem>>, vector<16x128xf32>
      tpu.vector_store %arg8[%c0_17, %c0_18], %20 {strides = array<i32>} : memref<16x128xf32, #tpu.memory_space<vmem>>, vector<16x128xf32>,
    } else {
    }
    %c0 = arith.constant 0 : index
    %c0_1 = arith.constant 0 : index
    %3 = vector.load %arg2[%c0, %c0_1] : memref<16x128xbf16, #tpu.memory_space<vmem>>, vector<16x128xbf16>
    %c0_2 = arith.constant 0 : index
    %c0_3 = arith.constant 0 : index
    %4 = vector.load %arg3[%c0_2, %c0_3] : memref<128x256xbf16, #tpu.memory_space<vmem>>, vector<128x256xbf16>
    %cst = arith.constant dense<0.000000e+00> : vector<16x256xf32>
    %5 = tpu.matmul %3, %4, %cst {dimension_numbers = #tpu.dot_dimension_numbers<[1], [0], [0], [1], [0, 0, 1, 1], [], []>} : vector<16x128xbf16>, vector<128x256xbf16>, vector<16x256xf32> -> vector<16x256xf32>
    %c0_4 = arith.constant 0 : index
    %c0_5 = arith.constant 0 : index
    %6 = vector.load %arg4[%c0_4, %c0_5] : memref<1x256xf32, #tpu.memory_space<vmem>>, vector<1x256xf32>
    %7 = vector.broadcast %6 : vector<1x256xf32> to vector<16x256xf32>
    %8 = arith.addf %5, %7 : vector<16x256xf32>
    %cst_6 = arith.constant 0.000000e+00 : f32
    %9 = vector.broadcast %cst_6 : f32 to vector<16x256xf32>
    %10 = arith.maximumf %8, %9 : vector<16x256xf32>
    %c0_7 = arith.constant 0 : index
    %c0_8 = arith.constant 0 : index
    %11 = vector.load %arg8[%c0_7, %c0_8] : memref<16x128xf32, #tpu.memory_space<vmem>>, vector<16x128xf32>
    %12 = arith.truncf %10 : vector<16x256xf32> to vector<16x256xbf16>
    %c0_9 = arith.constant 0 : index
    %c0_10 = arith.constant 0 : index
    %13 = vector.load %arg5[%c0_9, %c0_10] : memref<256x128xbf16, #tpu.memory_space<vmem>>, vector<256x128xbf16>
    %cst_11 = arith.constant dense<0.000000e+00> : vector<16x128xf32>
    %14 = tpu.matmul %12, %13, %cst_11 {dimension_numbers = #tpu.dot_dimension_numbers<[1], [0], [0], [1], [0, 0, 1, 1], [], []>} : vector<16x256xbf16>, vector<256x128xbf16>, vector<16x128xf32> -> vector<16x128xf32>
    %15 = arith.addf %11, %14 : vector<16x128xf32>
    %c0_12 = arith.constant 0 : index
    %c0_13 = arith.constant 0 : index
    %16 = vector.load %arg8[%c0_12, %c0_13] : memref<16x128xf32, #tpu.memory_space<vmem>>, vector<16x128xf32>
    tpu.vector_store %arg8[%c0_12, %c0_13], %15 {strides = array<i32>} : memref<16x128xf32, #tpu.memory_space<vmem>>, vector<16x128xf32>,
    %c0_i32_14 = arith.constant 0 : i32
    %17 = arith.cmpi eq, %arg1, %c0_i32_14 : i32
    %18 = arith.extui %17 : i1 to i32
    %c0_i32_15 = arith.constant 0 : i32
    %19 = arith.cmpi ne, %18, %c0_i32_15 : i32
    scf.if %19 {
      %c0_16 = arith.constant 0 : index
      %c0_17 = arith.constant 0 : index
      %20 = vector.load %arg8[%c0_16, %c0_17] : memref<16x128xf32, #tpu.memory_space<vmem>>, vector<16x128xf32>
      %c0_18 = arith.constant 0 : index
      %c0_19 = arith.constant 0 : index
      %21 = vector.load %arg6[%c0_18, %c0_19] : memref<1x128xf32, #tpu.memory_space<vmem>>, vector<1x128xf32>
      %22 = vector.broadcast %21 : vector<1x128xf32> to vector<16x128xf32>
      %23 = arith.addf %20, %22 : vector<16x128xf32>
      %c0_20 = arith.constant 0 : index
      %c0_21 = arith.constant 0 : index
      %24 = vector.load %arg7[%c0_20, %c0_21] : memref<16x128xf32, #tpu.memory_space<vmem>>, vector<16x128xf32>
      tpu.vector_store %arg7[%c0_20, %c0_21], %23 {strides = array<i32>} : memref<16x128xf32, #tpu.memory_space<vmem>>, vector<16x128xf32>,
    } else {
    }
    return
  }
  func.func @transform_0(%arg0: i32, %arg1: i32) -> (i32, i32) {
    %c0_i32 = arith.constant 0 : i32
    %c0_i32_0 = arith.constant 0 : i32
    return %arg0, %c0_i32 : i32, i32
  }
  func.func @transform_1(%arg0: i32, %arg1: i32) -> (i32, i32) {
    %c0_i32 = arith.constant 0 : i32
    %c0_i32_0 = arith.constant 0 : i32
    return %c0_i32, %arg1 : i32, i32
  }
  func.func @transform_2(%arg0: i32, %arg1: i32) -> (i32, i32) {
    %c0_i32 = arith.constant 0 : i32
    %c0_i32_0 = arith.constant 0 : i32
    return %c0_i32, %arg1 : i32, i32
  }
  func.func @transform_3(%arg0: i32, %arg1: i32) -> (i32, i32) {
    %c0_i32 = arith.constant 0 : i32
    %c0_i32_0 = arith.constant 0 : i32
    return %arg1, %c0_i32 : i32, i32
  }
  func.func @transform_4(%arg0: i32, %arg1: i32) -> (i32, i32) {
    %c0_i32 = arith.constant 0 : i32
    %c0_i32_0 = arith.constant 0 : i32
    %c0_i32_1 = arith.constant 0 : i32
    return %c0_i32, %c0_i32_0 : i32, i32
  }
  func.func @transform_5(%arg0: i32, %arg1: i32) -> (i32, i32) {
    %c0_i32 = arith.constant 0 : i32
    %c0_i32_0 = arith.constant 0 : i32
    return %arg0, %c0_i32 : i32, i32
  }
}

</mosaic_0001>

<llo_original>
// kernel: feed_forward.1
$region0: #{feed_forward.1}
  #allocation0 [shape = 'u32[]', space=smem, size = 0x4, offset = 0x4, fixed_abs, tag = 'smem constant byte address 0x4 - core index']
  #allocation1 [shape = 'u32[144,128]{1,0:T(1,128)}', space=vmem, size = 0x12000, scoped, tag = 'internal scratch']
  #allocation2 [shape = 'f32[16,128]{1,0:T(8,128)}', space=vmem, size = 0x2000, scoped, tag = 'scratch operand']
  %s0 = inlined_call_operand.vmem [shape: bf16[16,128], index: 0, kind: input, shape index: {}]
  %s1 = inlined_call_operand.vmem [shape: bf16[128,256], index: 1, kind: input, shape index: {}]
  %s2 = inlined_call_operand.vmem [shape: f32[1,256], index: 2, kind: input, shape index: {}]
  %s3 = inlined_call_operand.vmem [shape: bf16[256,128], index: 3, kind: input, shape index: {}]
  %s4 = inlined_call_operand.vmem [shape: f32[1,128], index: 4, kind: input, shape index: {}]
  %s5 = inlined_call_operand.vmem [shape: f32[16,128], index: 5, kind: output, shape index: {}]
  %s6 = sld [smem:[#allocation0]]
  $region38: #{feed_forward.1} parent=0
    _
  %s8 = ssub.s32 1, %s6
  %s9 = scalar_select 0, %s8, %s6
  // Predicated region
  $region2: #{feed_forward.1} parent=0 // pred_check
    _
  $region3: #{feed_forward.1} parent=0 // pred_check_branch
    %11 = sbr.rel (0) target = $region5
  $region4: #{feed_forward.1} parent=0 // pred_region
    _
  $region5: #{feed_forward.1} parent=0 // pred_fallthru
    _
  // Predicated region
  $region6: #{feed_forward.1} parent=0 // pred_check
    _
  $region7: #{feed_forward.1} parent=0 // pred_check_branch
    %13 = sbr.rel (0) target = $region9
  $region8: #{feed_forward.1} parent=0 // pred_region
    _
  $region9: #{feed_forward.1} parent=0 // pred_fallthru
    _
  // Predicated region
  $region10: #{feed_forward.1} parent=0 // pred_check
    _
  $region11: #{feed_forward.1} parent=0 // pred_check_branch
    %15 = sbr.rel (0) target = $region13
  $region12: #{feed_forward.1} parent=0 // pred_region
    _
  $region13: #{feed_forward.1} parent=0 // pred_fallthru
    _
  // Predicated region
  $region14: #{feed_forward.1} parent=0 // pred_check
    _
  $region15: #{feed_forward.1} parent=0 // pred_check_branch
    %17 = sbr.rel (0) target = $region17
  $region16: #{feed_forward.1} parent=0 // pred_region
    _
  $region17: #{feed_forward.1} parent=0 // pred_fallthru
    _
  // Predicated region
  $region18: #{feed_forward.1} parent=0 // pred_check
    _
  $region19: #{feed_forward.1} parent=0 // pred_check_branch
    %19 = sbr.rel (0) target = $region21
  $region20: #{feed_forward.1} parent=0 // pred_region
    _
  $region21: #{feed_forward.1} parent=0 // pred_fallthru
    _
  %p21 = scmp.eq.s32.totalorder 0, 0
  // Predicated region
  $region22: #{feed_forward.1} parent=0 // pred_check
    %p22 = pneg %p21
  $region23: #{feed_forward.1} parent=0 // pred_check_branch
    %24 = sbr.rel (%p22) target = $region25
  $region24: #{feed_forward.1} parent=0 // pred_region
    %25 = vst [vmem:[#allocation2] sm:$0xff] 0.0
    %26 = vst [vmem:[#allocation2 + $0x8] sm:$0xff] 0.0
  $region25: #{feed_forward.1} parent=0 // pred_fallthru
    _
  %v27 = vld [vmem:[%s0] sm:$0xf]
  %v28 = vld [vmem:[%s0 + $0x4] sm:$0xf]
  %v29 = vld [vmem:[%s1] sm:$0xff]
  %v30 = vld [vmem:[%s1 + $0x8] sm:$0xff]
  %v31 = vld [vmem:[%s1 + $0x10] sm:$0xff]
  %v32 = vld [vmem:[%s1 + $0x18] sm:$0xff]
  %v33 = vld [vmem:[%s1 + $0x20] sm:$0xff]
  %v34 = vld [vmem:[%s1 + $0x28] sm:$0xff]
  %v35 = vld [vmem:[%s1 + $0x30] sm:$0xff]
  %v36 = vld [vmem:[%s1 + $0x38] sm:$0xff]
  %v37 = vld [vmem:[%s1 + $0x40] sm:$0xff]
  %v38 = vld [vmem:[%s1 + $0x48] sm:$0xff]
  %v39 = vld [vmem:[%s1 + $0x50] sm:$0xff]
  %v40 = vld [vmem:[%s1 + $0x58] sm:$0xff]
  %v41 = vld [vmem:[%s1 + $0x60] sm:$0xff]
  %v42 = vld [vmem:[%s1 + $0x68] sm:$0xff]
  %v43 = vld [vmem:[%s1 + $0x70] sm:$0xff]
  %v44 = vld [vmem:[%s1 + $0x78] sm:$0xff]
  %v45 = vld [vmem:[%s2] sm:$0x3]
  %v47 = vlaneseq
  %v48 = vshrl.u32 %v47, 7
  %v49 = vsub.s32 0, %v48
  %v50 = vrot.slane %v45, %v49
  %v51 = vlaneseq
  %v52 = vshrl.u32 %v51, 7
  %v53 = vsub.s32 1, %v52
  %v54 = vrot.slane %v45, %v53
  %v59 = vunpack.c.l.b16 %v27
  %v60 = vunpack.c.l.b16 %v28
  %v61 = vpack.c.b16 %v60, %v59
  %v79 = vunpack.c.l.b16 %v29
  %v80 = vunpack.c.h.b16 %v29
  %v81 = vunpack.c.l.b16 %v30
  %v82 = vunpack.c.h.b16 %v30
  %v83 = vunpack.c.l.b16 %v31
  %v84 = vunpack.c.h.b16 %v31
  %v85 = vunpack.c.l.b16 %v32
  %v86 = vunpack.c.h.b16 %v32
  %v87 = vunpack.c.l.b16 %v33
  %v88 = vunpack.c.h.b16 %v33
  %v89 = vunpack.c.l.b16 %v34
  %v90 = vunpack.c.h.b16 %v34
  %v91 = vunpack.c.l.b16 %v35
  %v92 = vunpack.c.h.b16 %v35
  %v93 = vunpack.c.l.b16 %v36
  %v94 = vunpack.c.h.b16 %v36
  %v95 = vunpack.c.l.b16 %v37
  %v96 = vunpack.c.h.b16 %v37
  %v97 = vunpack.c.l.b16 %v38
  %v98 = vunpack.c.h.b16 %v38
  %v99 = vunpack.c.l.b16 %v39
  %v100 = vunpack.c.h.b16 %v39
  %v101 = vunpack.c.l.b16 %v40
  %v102 = vunpack.c.h.b16 %v40
  %v103 = vunpack.c.l.b16 %v41
  %v104 = vunpack.c.h.b16 %v41
  %v105 = vunpack.c.l.b16 %v42
  %v106 = vunpack.c.h.b16 %v42
  %v107 = vunpack.c.l.b16 %v43
  %v108 = vunpack.c.h.b16 %v43
  %v109 = vunpack.c.l.b16 %v44
  %v110 = vunpack.c.h.b16 %v44
  %v111 = vpack.c.b16 %v81, %v79
  %v112 = vpack.c.b16 %v82, %v80
  %v113 = vpack.c.b16 %v85, %v83
  %v114 = vpack.c.b16 %v86, %v84
  %v115 = vpack.c.b16 %v89, %v87
  %v116 = vpack.c.b16 %v90, %v88
  %v117 = vpack.c.b16 %v93, %v91
  %v118 = vpack.c.b16 %v94, %v92
  %v119 = vpack.c.b16 %v97, %v95
  %v120 = vpack.c.b16 %v98, %v96
  %v121 = vpack.c.b16 %v101, %v99
  %v122 = vpack.c.b16 %v102, %v100
  %v123 = vpack.c.b16 %v105, %v103
  %v124 = vpack.c.b16 %v106, %v104
  %v125 = vpack.c.b16 %v109, %v107
  %v126 = vpack.c.b16 %v110, %v108
  %143 = vmatprep.subr.bf16.mxu0 %v112
  %144 = vmatpush1.bf16.msra.mxu0 %v111
  %145 = vmatprep.subr.bf16.mxu0 %v114
  %146 = vmatpush1.bf16.msra.mxu0 %v113
  %147 = vmatprep.subr.bf16.mxu0 %v116
  %148 = vmatpush1.bf16.msra.mxu0 %v115
  %149 = vmatprep.subr.bf16.mxu0 %v118
  %150 = vmatpush1.bf16.msra.mxu0 %v117
  %151 = vmatprep.subr.bf16.mxu0 %v120
  %152 = vmatpush1.bf16.msra.mxu0 %v119
  %153 = vmatprep.subr.bf16.mxu0 %v122
  %154 = vmatpush1.bf16.msra.mxu0 %v121
  %155 = vmatprep.subr.bf16.mxu0 %v124
  %156 = vmatpush1.bf16.msra.mxu0 %v123
  %157 = vmatprep.subr.bf16.mxu0 %v126
  %158 = vmatpush1.bf16.msra.mxu0 %v125
  %159 = vmatprep.subr.bf16.mxu0 0
  %160 = vmatpush1.bf16.msra.mxu0 0
  %161 = vmatprep.subr.bf16.mxu0 0
  %162 = vmatpush1.bf16.msra.mxu0 0
  %163 = vmatprep.subr.bf16.mxu0 0
  %164 = vmatpush1.bf16.msra.mxu0 0
  %165 = vmatprep.subr.bf16.mxu0 0
  %166 = vmatpush1.bf16.msra.mxu0 0
  %167 = vmatprep.subr.bf16.mxu0 0
  %168 = vmatpush1.bf16.msra.mxu0 0
  %169 = vmatprep.subr.bf16.mxu0 0
  %170 = vmatpush1.bf16.msra.mxu0 0
  %171 = vmatprep.subr.bf16.mxu0 0
  %172 = vmatpush1.bf16.msra.mxu0 0
  %173 = vmatprep.subr.bf16.mxu0 0
  %174 = vmatpush1.bf16.msra.mxu0 0
  %175 = vmatprep.mubr.bf16.mxu0 0
  %176 = vmatmul.mubr.bf16.gmra.mrb[0].mxu0 %v61
  %v177 = vpop.f32.mrb[0].mxu0
  %v178 = vadd.f32 %v50, %v177
  %v179 = vpop.f32.mrb[0].mxu0
  %v180 = vadd.f32 %v54, %v179
  %v181 = vpop.f32.mrb[0].mxu0
  %v182 = vadd.f32 %v50, %v181
  %v183 = vpop.f32.mrb[0].mxu0
  %v184 = vadd.f32 %v54, %v183
  %185 = vdwg.mxu0
  %v186 = vmax.f32 %v178, 0.0
  %v187 = vmax.f32 %v180, 0.0
  %v188 = vmax.f32 %v182, 0.0
  %v189 = vmax.f32 %v184, 0.0
  %v190 = vld [vmem:[#allocation2] sm:$0xff]
  %v191 = vld [vmem:[#allocation2 + $0x8] sm:$0xff]
  %v192 = vpack.c.bf16 %v188, %v186
  %v193 = vpack.c.bf16 %v189, %v187
  %v194 = vld [vmem:[%s3] sm:$0xf]
  %v195 = vld [vmem:[%s3 + $0x4] sm:$0xf]
  %v196 = vld [vmem:[%s3 + $0x8] sm:$0xf]
  %v197 = vld [vmem:[%s3 + $0xc] sm:$0xf]
  %v198 = vld [vmem:[%s3 + $0x10] sm:$0xf]
  %v199 = vld [vmem:[%s3 + $0x14] sm:$0xf]
  %v200 = vld [vmem:[%s3 + $0x18] sm:$0xf]
  %v201 = vld [vmem:[%s3 + $0x1c] sm:$0xf]
  %v202 = vld [vmem:[%s3 + $0x20] sm:$0xf]
  %v203 = vld [vmem:[%s3 + $0x24] sm:$0xf]
  %v204 = vld [vmem:[%s3 + $0x28] sm:$0xf]
  %v205 = vld [vmem:[%s3 + $0x2c] sm:$0xf]
  %v206 = vld [vmem:[%s3 + $0x30] sm:$0xf]
  %v207 = vld [vmem:[%s3 + $0x34] sm:$0xf]
  %v208 = vld [vmem:[%s3 + $0x38] sm:$0xf]
  %v209 = vld [vmem:[%s3 + $0x3c] sm:$0xf]
  %v210 = vld [vmem:[%s3 + $0x40] sm:$0xf]
  %v211 = vld [vmem:[%s3 + $0x44] sm:$0xf]
  %v212 = vld [vmem:[%s3 + $0x48] sm:$0xf]
  %v213 = vld [vmem:[%s3 + $0x4c] sm:$0xf]
  %v214 = vld [vmem:[%s3 + $0x50] sm:$0xf]
  %v215 = vld [vmem:[%s3 + $0x54] sm:$0xf]
  %v216 = vld [vmem:[%s3 + $0x58] sm:$0xf]
  %v217 = vld [vmem:[%s3 + $0x5c] sm:$0xf]
  %v218 = vld [vmem:[%s3 + $0x60] sm:$0xf]
  %v219 = vld [vmem:[%s3 + $0x64] sm:$0xf]
  %v220 = vld [vmem:[%s3 + $0x68] sm:$0xf]
  %v221 = vld [vmem:[%s3 + $0x6c] sm:$0xf]
  %v222 = vld [vmem:[%s3 + $0x70] sm:$0xf]
  %v223 = vld [vmem:[%s3 + $0x74] sm:$0xf]
  %v224 = vld [vmem:[%s3 + $0x78] sm:$0xf]
  %v225 = vld [vmem:[%s3 + $0x7c] sm:$0xf]
  %v258 = vunpack.c.l.b16 %v194
  %v259 = vunpack.c.l.b16 %v195
  %v260 = vunpack.c.l.b16 %v196
  %v261 = vunpack.c.l.b16 %v197
  %v262 = vunpack.c.l.b16 %v198
  %v263 = vunpack.c.l.b16 %v199
  %v264 = vunpack.c.l.b16 %v200
  %v265 = vunpack.c.l.b16 %v201
  %v266 = vunpack.c.l.b16 %v202
  %v267 = vunpack.c.l.b16 %v203
  %v268 = vunpack.c.l.b16 %v204
  %v269 = vunpack.c.l.b16 %v205
  %v270 = vunpack.c.l.b16 %v206
  %v271 = vunpack.c.l.b16 %v207
  %v272 = vunpack.c.l.b16 %v208
  %v273 = vunpack.c.l.b16 %v209
  %v274 = vunpack.c.l.b16 %v210
  %v275 = vunpack.c.l.b16 %v211
  %v276 = vunpack.c.l.b16 %v212
  %v277 = vunpack.c.l.b16 %v213
  %v278 = vunpack.c.l.b16 %v214
  %v279 = vunpack.c.l.b16 %v215
  %v280 = vunpack.c.l.b16 %v216
  %v281 = vunpack.c.l.b16 %v217
  %v282 = vunpack.c.l.b16 %v218
  %v283 = vunpack.c.l.b16 %v219
  %v284 = vunpack.c.l.b16 %v220
  %v285 = vunpack.c.l.b16 %v221
  %v286 = vunpack.c.l.b16 %v222
  %v287 = vunpack.c.l.b16 %v223
  %v288 = vunpack.c.l.b16 %v224
  %v289 = vunpack.c.l.b16 %v225
  %v290 = vpack.c.b16 %v259, %v258
  %v291 = vpack.c.b16 %v261, %v260
  %v292 = vpack.c.b16 %v263, %v262
  %v293 = vpack.c.b16 %v265, %v264
  %v294 = vpack.c.b16 %v267, %v266
  %v295 = vpack.c.b16 %v269, %v268
  %v296 = vpack.c.b16 %v271, %v270
  %v297 = vpack.c.b16 %v273, %v272
  %v298 = vpack.c.b16 %v275, %v274
  %v299 = vpack.c.b16 %v277, %v276
  %v300 = vpack.c.b16 %v279, %v278
  %v301 = vpack.c.b16 %v281, %v280
  %v302 = vpack.c.b16 %v283, %v282
  %v303 = vpack.c.b16 %v285, %v284
  %v304 = vpack.c.b16 %v287, %v286
  %v305 = vpack.c.b16 %v289, %v288
  %322 = vmatprep.subr.bf16.mxu0 0
  %323 = vmatpush1.bf16.msra.mxu0 %v290
  %324 = vmatprep.subr.bf16.mxu0 0
  %325 = vmatpush1.bf16.msra.mxu0 %v291
  %326 = vmatprep.subr.bf16.mxu0 0
  %327 = vmatpush1.bf16.msra.mxu0 %v292
  %328 = vmatprep.subr.bf16.mxu0 0
  %329 = vmatpush1.bf16.msra.mxu0 %v293
  %330 = vmatprep.subr.bf16.mxu0 0
  %331 = vmatpush1.bf16.msra.mxu0 %v294
  %332 = vmatprep.subr.bf16.mxu0 0
  %333 = vmatpush1.bf16.msra.mxu0 %v295
  %334 = vmatprep.subr.bf16.mxu0 0
  %335 = vmatpush1.bf16.msra.mxu0 %v296
  %336 = vmatprep.subr.bf16.mxu0 0
  %337 = vmatpush1.bf16.msra.mxu0 %v297
  %338 = vmatprep.subr.bf16.mxu0 0
  %339 = vmatpush1.bf16.msra.mxu0 %v298
  %340 = vmatprep.subr.bf16.mxu0 0
  %341 = vmatpush1.bf16.msra.mxu0 %v299
  %342 = vmatprep.subr.bf16.mxu0 0
  %343 = vmatpush1.bf16.msra.mxu0 %v300
  %344 = vmatprep.subr.bf16.mxu0 0
  %345 = vmatpush1.bf16.msra.mxu0 %v301
  %346 = vmatprep.subr.bf16.mxu0 0
  %347 = vmatpush1.bf16.msra.mxu0 %v302
  %348 = vmatprep.subr.bf16.mxu0 0
  %349 = vmatpush1.bf16.msra.mxu0 %v303
  %350 = vmatprep.subr.bf16.mxu0 0
  %351 = vmatpush1.bf16.msra.mxu0 %v304
  %352 = vmatprep.subr.bf16.mxu0 0
  %353 = vmatpush1.bf16.msra.mxu0 %v305
  %354 = vmatprep.mubr.bf16.mxu0 %v193
  %355 = vmatmul.mubr.bf16.gmra.mrb[0].mxu0 %v192
  %v356 = vpop.f32.mrb[0].mxu0
  %v357 = vadd.f32 0.0, %v356
  %v358 = vpop.f32.mrb[0].mxu0
  %v359 = vpop.f32.mrb[0].mxu0
  %v360 = vadd.f32 0.0, %v359
  %v361 = vpop.f32.mrb[0].mxu0
  %362 = vdwg.mxu0
  %v363 = vadd.f32 %v190, %v357
  %v364 = vadd.f32 %v191, %v360
  %365 = vst [vmem:[#allocation2] sm:$0xff] %v363
  %366 = vst [vmem:[#allocation2 + $0x8] sm:$0xff] %v364
  // Predicated region
  $region26: #{feed_forward.1} parent=0 // pred_check
    %p367 = pneg %p21
  $region27: #{feed_forward.1} parent=0 // pred_check_branch
    %369 = sbr.rel (%p367) target = $region29
  $region28: #{feed_forward.1} parent=0 // pred_region
    %v370 = vld [vmem:[#allocation2] sm:$0xff]
    %v371 = vld [vmem:[#allocation2 + $0x8] sm:$0xff]
    %v372 = vld [vmem:[%s4] sm:$0x1]
    %v374 = vlaneseq
    %v375 = vshrl.u32 %v374, 7
    %v376 = vsub.s32 0, %v375
    %v377 = vrot.slane %v372, %v376
    %v379 = vadd.f32 %v370, %v377
    %v380 = vadd.f32 %v371, %v377
    %381 = vst [vmem:[%s5] sm:$0xff] %v379
    %382 = vst [vmem:[%s5 + $0x8] sm:$0xff] %v380
  $region29: #{feed_forward.1} parent=0 // pred_fallthru
    _
  // Predicated region
  $region30: #{feed_forward.1} parent=0 // pred_check
    _
  $region31: #{feed_forward.1} parent=0 // pred_check_branch
    %384 = sbr.rel (0) target = $region33
  $region32: #{feed_forward.1} parent=0 // pred_region
    _
  $region33: #{feed_forward.1} parent=0 // pred_fallthru
    _
  // Predicated region
  $region34: #{feed_forward.1} parent=0 // pred_check
    _
  $region35: #{feed_forward.1} parent=0 // pred_check_branch
    %386 = sbr.rel (0) target = $region37
  $region36: #{feed_forward.1} parent=0 // pred_region
    _
  $region37: #{feed_forward.1} parent=0 // pred_fallthru
    _

</llo_original>
